<compile_context>
chip_gen: v7x
topology: tpu7x:2x2x1
jax: 0.10.0
libtpu: 0.0.40
codegen_flags: <defaults>
</compile_context>

<pallas_src>
import functools

import jax
import jax.numpy as jnp
from jax.experimental import pallas as pl
from jax.experimental.pallas import tpu as pltpu

_VMEM_LIMIT = 48 * 1024 * 1024  # <= v7x physical 64 MiB, > default scoped limit


def _round_up(x, m):
    return ((x + m - 1) // m) * m


# ---------------------------------------------------------------------------
# Tiled fused matmul kernel: out = relu?( x @ w + bias (+ residual) )
# (BN scale is already folded into w.)
# ---------------------------------------------------------------------------
def _mm_kernel(x_ref, w_ref, b_ref, o_ref, acc_ref, *, apply_relu):
    k = pl.program_id(2)

    @pl.when(k == 0)
    def _():
        acc_ref[...] = jnp.zeros_like(acc_ref)

    acc_ref[...] += jnp.dot(x_ref[...], w_ref[...],
                            preferred_element_type=jnp.float32)

    @pl.when(k == pl.num_programs(2) - 1)
    def _():
        y = acc_ref[...] + b_ref[...]
        if apply_relu:
            y = jnp.maximum(y, 0.0)
        o_ref[...] = y.astype(o_ref.dtype)


def _mm_res_kernel(x_ref, w_ref, b_ref, r_ref, o_ref, acc_ref, *, apply_relu):
    k = pl.program_id(2)

    @pl.when(k == 0)
    def _():
        acc_ref[...] = jnp.zeros_like(acc_ref)

    acc_ref[...] += jnp.dot(x_ref[...], w_ref[...],
                            preferred_element_type=jnp.float32)

    @pl.when(k == pl.num_programs(2) - 1)
    def _():
        y = acc_ref[...] + b_ref[...] + r_ref[...].astype(jnp.float32)
        if apply_relu:
            y = jnp.maximum(y, 0.0)
        o_ref[...] = y.astype(o_ref.dtype)


def fused_matmul_bn(x, w, bias, residual=None, apply_relu=True,
                    out_dtype=jnp.bfloat16):
    """x:(M,K), w:(K,N) scale-folded, bias:(N,), residual:(M,N) or None."""
    M, K = x.shape
    Kw, N = w.shape
    assert K == Kw

    # Modest tiles (<=512) keep 2x-double-buffered inputs + accumulator well
    # under the scoped VMEM budget on v5e / v6e / v7x while still being large
    # enough to approach the HBM roofline for mem-bound shapes.
    tm = min(512, _round_up(M, 8))
    tn = min(256, _round_up(N, 128))
    tk = min(512, _round_up(K, 128))
    Mp, Np, Kp = _round_up(M, tm), _round_up(N, tn), _round_up(K, tk)

    # bf16 operands (half the DMA bytes), f32 accumulation.
    xp = jnp.pad(x.astype(jnp.bfloat16), ((0, Mp - M), (0, Kp - K)))
    wp = jnp.pad(w.astype(jnp.bfloat16), ((0, Kp - K), (0, Np - N)))
    bp = jnp.pad(bias.astype(jnp.float32).reshape(1, N), ((0, 0), (0, Np - N)))

    grid = (Mp // tm, Np // tn, Kp // tk)

    x_spec = pl.BlockSpec((tm, tk), lambda i, j, k: (i, k))
    w_spec = pl.BlockSpec((tk, tn), lambda i, j, k: (k, j))   # no dependence on i
    b_spec = pl.BlockSpec((1, tn), lambda i, j, k: (0, j))
    o_spec = pl.BlockSpec((tm, tn), lambda i, j, k: (i, j))

    if residual is not None:
        rp = jnp.pad(residual.astype(jnp.bfloat16), ((0, Mp - M), (0, Np - N)))
        kernel = functools.partial(_mm_res_kernel, apply_relu=apply_relu)
        in_specs = [x_spec, w_spec, b_spec,
                    pl.BlockSpec((tm, tn), lambda i, j, k: (i, j))]
        operands = (xp, wp, bp, rp)
    else:
        kernel = functools.partial(_mm_kernel, apply_relu=apply_relu)
        in_specs = [x_spec, w_spec, b_spec]
        operands = (xp, wp, bp)

    out = pl.pallas_call(
        kernel,
        out_shape=jax.ShapeDtypeStruct((Mp, Np), out_dtype),
        grid=grid,
        in_specs=in_specs,
        out_specs=o_spec,
        scratch_shapes=[pltpu.VMEM((tm, tn), jnp.float32)],
        compiler_params=pltpu.CompilerParams(
            dimension_semantics=("parallel", "parallel", "arbitrary"),
            vmem_limit_bytes=_VMEM_LIMIT,
        ),
    )(*operands)
    return out[:M, :N]


# ---------------------------------------------------------------------------
# Fused 3x3 / pad=1 / stride=1 conv + folded BN + ReLU.
# Patches are built in VMEM inside the kernel (no HBM im2col); the 9 taps are
# accumulated as 9 MXU matmuls per image.
# ---------------------------------------------------------------------------
def _conv3x3_s1_kernel(x_ref, w_ref, b_ref, o_ref):
    # x_ref: (Hp, Wp, C) padded image, bf16
    # w_ref: (9*C, Coutp) bf16, rows ordered (kh, kw, cin), BN scale folded
    # b_ref: (1, Coutp) f32 ; o_ref: (Ho*Wo, Coutp)
    Hp, Wp, C = x_ref.shape
    Ho, Wo = Hp - 2, Wp - 2
    xv = x_ref[...]
    wv = w_ref[...]
    acc = jnp.zeros(o_ref.shape, jnp.float32)
    for dh in range(3):
        for dw in range(3):
            tap = dh * 3 + dw
            patch = xv[dh:dh + Ho, dw:dw + Wo, :].reshape(Ho * Wo, C)
            acc += jnp.dot(patch, wv[tap * C:(tap + 1) * C, :],
                           preferred_element_type=jnp.float32)
    y = jnp.maximum(acc + b_ref[...], 0.0)
    o_ref[...] = y.astype(o_ref.dtype)


def conv3x3_bn_relu_s1(x_nhwc, w2, b2):
    N, H, W, C = x_nhwc.shape
    assert w2.shape[0] == 9 * C
    Cout = w2.shape[1]
    Coutp = _round_up(Cout, 128)
    Hp, Wp = H + 2, W + 2

    xpad = jnp.pad(x_nhwc.astype(jnp.bfloat16),
                   ((0, 0), (1, 1), (1, 1), (0, 0)))
    wp = jnp.pad(w2.astype(jnp.bfloat16), ((0, 0), (0, Coutp - Cout)))
    bp = jnp.pad(b2.astype(jnp.float32).reshape(1, Cout),
                 ((0, 0), (0, Coutp - Cout)))

    out = pl.pallas_call(
        _conv3x3_s1_kernel,
        out_shape=jax.ShapeDtypeStruct((N, H * W, Coutp), jnp.bfloat16),
        grid=(N,),
        in_specs=[
            pl.BlockSpec((None, Hp, Wp, C), lambda n: (n, 0, 0, 0)),
            pl.BlockSpec((9 * C, Coutp), lambda n: (0, 0)),   # weights resident
            pl.BlockSpec((1, Coutp), lambda n: (0, 0)),
        ],
        out_specs=pl.BlockSpec((None, H * W, Coutp), lambda n: (n, 0, 0)),
        compiler_params=pltpu.CompilerParams(
            dimension_semantics=("parallel",),
            vmem_limit_bytes=_VMEM_LIMIT,
        ),
    )(xpad, wp, bp)
    return out.reshape(N * H * W, Coutp)[:, :Cout]


# ---------------------------------------------------------------------------
# im2col fallback (only for stride > 1), plain-JAX glue, bf16
# ---------------------------------------------------------------------------
def _im2col_3x3(x_nhwc, stride):
    N, H, W, C = x_nhwc.shape
    xp = jnp.pad(x_nhwc, ((0, 0), (1, 1), (1, 1), (0, 0)))
    Ho = (H + 2 - 3) // stride + 1
    Wo = (W + 2 - 3) // stride + 1
    patches = []
    for dh in range(3):
        for dw in range(3):
            patches.append(
                xp[:, dh:dh + stride * Ho:stride, dw:dw + stride * Wo:stride, :])
    cols = jnp.concatenate(patches, axis=-1)   # (N, Ho, Wo, 9*C), (kh,kw,cin)
    return cols.reshape(N * Ho * Wo, 9 * C), (N, Ho, Wo)


# ---------------------------------------------------------------------------
# Parameters: deterministic weights, BN folded (inference), scale -> weights
# ---------------------------------------------------------------------------
def _fold_bn(key, channels, eps=1e-5):
    k1, k2, k3, k4 = jax.random.split(key, 4)
    gamma = 1.0 + 0.1 * jax.random.normal(k1, (channels,), jnp.float32)
    beta = 0.1 * jax.random.normal(k2, (channels,), jnp.float32)
    run_mean = 0.1 * jax.random.normal(k3, (channels,), jnp.float32)
    run_var = 1.0 + 0.1 * jax.random.uniform(k4, (channels,), jnp.float32)
    scale = gamma / jnp.sqrt(run_var + eps)
    bias = beta - run_mean * scale
    return scale, bias


def make_params(key, in_channels, out_channels, downsample):
    expansion = 4
    keys = jax.random.split(key, 8)
    p = {}
    # conv1: 1x1 -> (Cin, Cmid), BN scale folded into weight
    w1 = 0.1 * jax.random.normal(keys[0], (out_channels, in_channels), jnp.float32)
    s1, b1 = _fold_bn(keys[1], out_channels)
    p["w1"] = (w1.T * s1[None, :]).astype(jnp.bfloat16)
    p["b1"] = b1
    # conv2: 3x3 -> (9*Cmid, Cmid), rows ordered (kh, kw, cin)
    w2 = 0.1 * jax.random.normal(
        keys[2], (out_channels, out_channels, 3, 3), jnp.float32)
    s2, b2 = _fold_bn(keys[3], out_channels)
    w2m = jnp.transpose(w2, (2, 3, 1, 0)).reshape(9 * out_channels, out_channels)
    p["w2"] = (w2m * s2[None, :]).astype(jnp.bfloat16)
    p["b2"] = b2
    # conv3: 1x1 -> (Cmid, 4*Cmid)
    w3 = 0.1 * jax.random.normal(
        keys[4], (expansion * out_channels, out_channels), jnp.float32)
    s3, b3 = _fold_bn(keys[5], expansion * out_channels)
    p["w3"] = (w3.T * s3[None, :]).astype(jnp.bfloat16)
    p["b3"] = b3
    if downsample:
        wd = 0.1 * jax.random.normal(
            keys[6], (expansion * out_channels, in_channels), jnp.float32)
        sd, bd = _fold_bn(keys[7], expansion * out_channels)
        p["wd"] = (wd.T * sd[None, :]).astype(jnp.bfloat16)
        p["bd"] = bd
    return p


# ---------------------------------------------------------------------------
# Bottleneck forward (Pallas kernels)
# ---------------------------------------------------------------------------
def bottleneck_forward(x_nchw, params, stride=1, downsample=False):
    x = jnp.transpose(x_nchw, (0, 2, 3, 1)).astype(jnp.float32)  # NHWC
    N, H, W, Cin = x.shape
    c_exp = params["w3"].shape[1]
    if not downsample:
        assert stride == 1 and Cin == c_exp, (
            "identity residual requires stride==1 and Cin == 4*out_channels")
    x_bf = x.astype(jnp.bfloat16)

    # conv1 (1x1) + bn1 + relu
    h1 = fused_matmul_bn(x_bf.reshape(N * H * W, Cin),
                         params["w1"], params["b1"],
                         apply_relu=True, out_dtype=jnp.bfloat16)
    Cmid = h1.shape[1]

    # conv2 (3x3, stride, pad=1) + bn2 + relu
    if stride == 1:
        h2 = conv3x3_bn_relu_s1(h1.reshape(N, H, W, Cmid),
                                params["w2"], params["b2"])
        Ho, Wo = H, W
    else:
        # TODO(synk): strided path still materializes im2col in HBM.
        cols, (N, Ho, Wo) = _im2col_3x3(h1.reshape(N, H, W, Cmid), stride)
        h2 = fused_matmul_bn(cols, params["w2"], params["b2"],
                             apply_relu=True, out_dtype=jnp.bfloat16)

    # identity / downsample path (1x1 conv with stride + folded BN, no relu)
    if downsample:
        xs = x_bf[:, ::stride, ::stride, :][:, :Ho, :Wo, :]
        ident = fused_matmul_bn(xs.reshape(N * Ho * Wo, Cin),
                                params["wd"], params["bd"],
                                apply_relu=False, out_dtype=jnp.bfloat16)
    else:
        ident = x_bf.reshape(N * H * W, Cin)

    # conv3 (1x1) + bn3 + residual add + relu (fused in one kernel)
    out = fused_matmul_bn(h2, params["w3"], params["b3"],
                          residual=ident, apply_relu=True,
                          out_dtype=jnp.float32)
    return jnp.transpose(out.reshape(N, Ho, Wo, c_exp), (0, 3, 1, 2))  # NCHW


# ---------------------------------------------------------------------------
# Pure-JAX reference (same math / same bf16 rounding) for a sanity check
# ---------------------------------------------------------------------------
def bottleneck_reference(x_nchw, params, stride=1, downsample=False):
    x = jnp.transpose(x_nchw, (0, 2, 3, 1)).astype(jnp.float32)
    N, H, W, Cin = x.shape
    x_bf = x.astype(jnp.bfloat16)

    def mm(a, w, b, res=None, relu=True):
        y = jnp.dot(a.astype(jnp.float32), w.astype(jnp.float32),
                    preferred_element_type=jnp.float32)
        y = y + b[None, :]
        if res is not None:
            y = y + res.astype(jnp.float32)
        return jnp.maximum(y, 0.0) if relu else y

    h1 = mm(x_bf.reshape(N * H * W, Cin), params["w1"], params["b1"]
            ).astype(jnp.bfloat16)
    cols, (N, Ho, Wo) = _im2col_3x3(h1.reshape(N, H, W, -1), stride)
    h2 = mm(cols, params["w2"], params["b2"]).astype(jnp.bfloat16)
    if downsample:
        xs = x_bf[:, ::stride, ::stride, :][:, :Ho, :Wo, :]
        ident = mm(xs.reshape(N * Ho * Wo, Cin),
                   params["wd"], params["bd"], relu=False).astype(jnp.bfloat16)
    else:
        ident = x_bf.reshape(N * H * W, Cin)
    out = mm(h2, params["w3"], params["b3"], res=ident, relu=True)
    return jnp.transpose(out.reshape(N, Ho, Wo, -1), (0, 3, 1, 2))


if __name__ == "__main__":
    key = jax.random.PRNGKey(0)

    configs = [
        # identity-residual path (stride=1, Cin == 4*out_channels)
        dict(batch=2, in_channels=64, out_channels=16, spatial=8,
             stride=1, downsample=False),
        # projection path (stride=2 + downsample 1x1 conv)
        dict(batch=2, in_channels=16, out_channels=16, spatial=8,
             stride=2, downsample=True),
    ]

    for idx, cfg in enumerate(configs):
        k_x, k_p = jax.random.split(jax.random.fold_in(key, idx))
        x = jax.random.normal(
            k_x,
            (cfg["batch"], cfg["in_channels"], cfg["spatial"], cfg["spatial"]),
            jnp.float32)
        params = make_params(k_p, cfg["in_channels"], cfg["out_channels"],
                             cfg["downsample"])

        out = bottleneck_forward(x, params, stride=cfg["stride"],
                                 downsample=cfg["downsample"])
        out = jax.block_until_ready(out)
        ref = bottleneck_reference(x, params, stride=cfg["stride"],
                                   downsample=cfg["downsample"])

        so = cfg["spatial"] // cfg["stride"]
        assert out.shape == (cfg["batch"], 4 * cfg["out_channels"], so, so)
        assert bool(jnp.all(jnp.isfinite(out)))
        assert bool(jnp.allclose(out, ref, rtol=2e-2, atol=2e-2)), (
            float(jnp.max(jnp.abs(out - ref))))

    print("KERNEL_OK")
</pallas_src>

<mosaic_0001>
module attributes {stable_mosaic.version = 11 : i64} {
  func.func @_mm_kernel(%arg0: i32, %arg1: i32, %arg2: i32, %arg3: memref<128x128xbf16, #tpu.memory_space<vmem>>, %arg4: memref<128x128xbf16, #tpu.memory_space<vmem>>, %arg5: memref<1x128xf32, #tpu.memory_space<vmem>>, %arg6: memref<128x128xbf16, #tpu.memory_space<vmem>>, %arg7: memref<128x128xf32, #tpu.memory_space<vmem>>) attributes {dimension_semantics = [#tpu.dimension_semantics<parallel>, #tpu.dimension_semantics<parallel>, #tpu.dimension_semantics<arbitrary>], iteration_bounds = array<i64: 1, 1, 1>, scalar_prefetch = 0 : i64, scratch_operands = 1 : i64, tpu.core_type = #tpu.core_type<tc>, window_params = [{transform_indices = @transform_0, window_bounds = array<i64: 128, 128>}, {transform_indices = @transform_1, window_bounds = array<i64: 128, 128>}, {transform_indices = @transform_2, window_bounds = array<i64: 1, 128>}, {transform_indices = @transform_3, window_bounds = array<i64: 128, 128>}]} {
    %c0_i32 = arith.constant 0 : i32
    %0 = arith.cmpi eq, %arg2, %c0_i32 : i32
    %1 = arith.extui %0 : i1 to i32
    %c0_i32_0 = arith.constant 0 : i32
    %2 = arith.cmpi ne, %1, %c0_i32_0 : i32
    scf.if %2 {
      %cst_10 = arith.constant 0.000000e+00 : f32
      %12 = vector.broadcast %cst_10 : f32 to vector<128x128xf32>
      %c0_11 = arith.constant 0 : index
      %c0_12 = arith.constant 0 : index
      %13 = vector.load %arg7[%c0_11, %c0_12] : memref<128x128xf32, #tpu.memory_space<vmem>>, vector<128x128xf32>
      tpu.vector_store %arg7[%c0_11, %c0_12], %12 {strides = array<i32>} : memref<128x128xf32, #tpu.memory_space<vmem>>, vector<128x128xf32>,
    } else {
    }
    %c0 = arith.constant 0 : index
    %c0_1 = arith.constant 0 : index
    %3 = vector.load %arg7[%c0, %c0_1] : memref<128x128xf32, #tpu.memory_space<vmem>>, vector<128x128xf32>
    %c0_2 = arith.constant 0 : index
    %c0_3 = arith.constant 0 : index
    %4 = vector.load %arg3[%c0_2, %c0_3] : memref<128x128xbf16, #tpu.memory_space<vmem>>, vector<128x128xbf16>
    %c0_4 = arith.constant 0 : index
    %c0_5 = arith.constant 0 : index
    %5 = vector.load %arg4[%c0_4, %c0_5] : memref<128x128xbf16, #tpu.memory_space<vmem>>, vector<128x128xbf16>
    %cst = arith.constant dense<0.000000e+00> : vector<128x128xf32>
    %6 = tpu.matmul %4, %5, %cst {dimension_numbers = #tpu.dot_dimension_numbers<[1], [0], [0], [1], [0, 0, 1, 1], [], []>} : vector<128x128xbf16>, vector<128x128xbf16>, vector<128x128xf32> -> vector<128x128xf32>
    %7 = arith.addf %3, %6 : vector<128x128xf32>
    %c0_6 = arith.constant 0 : index
    %c0_7 = arith.constant 0 : index
    %8 = vector.load %arg7[%c0_6, %c0_7] : memref<128x128xf32, #tpu.memory_space<vmem>>, vector<128x128xf32>
    tpu.vector_store %arg7[%c0_6, %c0_7], %7 {strides = array<i32>} : memref<128x128xf32, #tpu.memory_space<vmem>>, vector<128x128xf32>,
    %c0_i32_8 = arith.constant 0 : i32
    %9 = arith.cmpi eq, %arg2, %c0_i32_8 : i32
    %10 = arith.extui %9 : i1 to i32
    %c0_i32_9 = arith.constant 0 : i32
    %11 = arith.cmpi ne, %10, %c0_i32_9 : i32
    scf.if %11 {
      %c0_10 = arith.constant 0 : index
      %c0_11 = arith.constant 0 : index
      %12 = vector.load %arg7[%c0_10, %c0_11] : memref<128x128xf32, #tpu.memory_space<vmem>>, vector<128x128xf32>
      %c0_12 = arith.constant 0 : index
      %c0_13 = arith.constant 0 : index
      %13 = vector.load %arg5[%c0_12, %c0_13] : memref<1x128xf32, #tpu.memory_space<vmem>>, vector<1x128xf32>
      %14 = vector.broadcast %13 : vector<1x128xf32> to vector<128x128xf32>
      %15 = arith.addf %12, %14 : vector<128x128xf32>
      %cst_14 = arith.constant 0.000000e+00 : f32
      %16 = vector.broadcast %cst_14 : f32 to vector<128x128xf32>
      %17 = arith.maximumf %15, %16 : vector<128x128xf32>
      %18 = arith.truncf %17 : vector<128x128xf32> to vector<128x128xbf16>
      %c0_15 = arith.constant 0 : index
      %c0_16 = arith.constant 0 : index
      %19 = vector.load %arg6[%c0_15, %c0_16] : memref<128x128xbf16, #tpu.memory_space<vmem>>, vector<128x128xbf16>
      tpu.vector_store %arg6[%c0_15, %c0_16], %18 {strides = array<i32>} : memref<128x128xbf16, #tpu.memory_space<vmem>>, vector<128x128xbf16>,
    } else {
    }
    return
  }
  func.func @transform_0(%arg0: i32, %arg1: i32, %arg2: i32) -> (i32, i32) {
    %c0_i32 = arith.constant 0 : i32
    return %arg0, %arg2 : i32, i32
  }
  func.func @transform_1(%arg0: i32, %arg1: i32, %arg2: i32) -> (i32, i32) {
    %c0_i32 = arith.constant 0 : i32
    return %arg2, %arg1 : i32, i32
  }
  func.func @transform_2(%arg0: i32, %arg1: i32, %arg2: i32) -> (i32, i32) {
    %c0_i32 = arith.constant 0 : i32
    %c0_i32_0 = arith.constant 0 : i32
    return %c0_i32, %arg1 : i32, i32
  }
  func.func @transform_3(%arg0: i32, %arg1: i32, %arg2: i32) -> (i32, i32) {
    %c0_i32 = arith.constant 0 : i32
    return %arg0, %arg1 : i32, i32
  }
}

</mosaic_0001>

<llo_original>
// kernel: tpu_custom_call.1
$region0: #{tpu_custom_call.1}
  #allocation0 [shape = 'u32[]', space=smem, size = 0x4, offset = 0x4, fixed_abs, tag = 'smem constant byte address 0x4 - core index']
  #allocation1 [shape = 'u32[144,128]{1,0:T(1,128)}', space=vmem, size = 0x12000, scoped, tag = 'internal scratch']
  #allocation2 [shape = 'f32[128,128]{1,0:T(8,128)}', space=vmem, size = 0x10000, scoped, tag = 'scratch operand']
  %s0 = inlined_call_operand.hbm [shape: bf16[128,128], index: 0, kind: input, shape index: {}]
  %s1 = inlined_call_operand.hbm [shape: bf16[128,128], index: 1, kind: input, shape index: {}]
  %s2 = inlined_call_operand.vmem [shape: f32[1,128], index: 2, kind: input, shape index: {}]
  %s3 = inlined_call_operand.hbm [shape: bf16[128,128], index: 3, kind: output, shape index: {}]
  %s4 = sld [smem:[#allocation0]]
  $region38: #{tpu_custom_call.1} parent=0
    _
  %s6 = ssub.s32 1, %s4
  %s7 = scalar_select 0, %s6, %s4
  $region1: #{tpu_custom_call.1} parent=0
    #allocation3 [shape = 'u8[32768]{0}', space=vmem, size = 0x8000, scoped, tag = 'input window, operand 0, single buffered']
    #allocation4 [shape = 's32[1]{0}', space=sflag, size = 0x4, scoped, tag = 'scoped memory for tpu_custom_call.1']
    #allocation5 [shape = 's32[1]{0}', space=sflag, size = 0x4, scoped, tag = 'scoped memory for tpu_custom_call.1']
    #allocation6 [shape = 'u8[32768]{0}', space=vmem, size = 0x8000, scoped, tag = 'input window, operand 1, single buffered']
    #allocation7 [shape = 's32[1]{0}', space=sflag, size = 0x4, scoped, tag = 'scoped memory for tpu_custom_call.1']
    #allocation8 [shape = 'u8[32768]{0}', space=vmem, size = 0x8000, scoped, tag = 'output window, operand 0, single buffered']
    %8 = vsyncpa [#allocation4], 0
    %9 = vsyncpa [#allocation7], 0
    %10 = vsyncpa [#allocation5], 0
    // Predicated region
    $region2: #{tpu_custom_call.1} parent=1 // pred_check
      _
    $region3: #{tpu_custom_call.1} parent=1 // pred_check_branch
      %12 = sbr.rel (0) target = $region5
    $region4: #{tpu_custom_call.1} parent=1 // pred_region
      %s14 = ssub.s32 1024, 1024
      %15 = vsyncadd [#allocation4], %s14
      %s16 = sshll.u32 [#allocation3], 4
      %s17 = int_to_ptr.vmem [resolvable:$true] %s16
      %22 = dma.hbm_to_vmem [thread:$0]  %s0, 1024, %s17, [#allocation4], 64, 64, 4
    $region5: #{tpu_custom_call.1} parent=1 // pred_fallthru
      _
    // Predicated region
    $region6: #{tpu_custom_call.1} parent=1 // pred_check
      _
    $region7: #{tpu_custom_call.1} parent=1 // pred_check_branch
      %24 = sbr.rel (0) target = $region9
    $region8: #{tpu_custom_call.1} parent=1 // pred_region
      %s26 = ssub.s32 1024, 1024
      %27 = vsyncadd [#allocation7], %s26
      %s28 = sshll.u32 [#allocation6], 4
      %s29 = int_to_ptr.vmem [resolvable:$true] %s28
      %34 = dma.hbm_to_vmem [thread:$0]  %s1, 1024, %s29, [#allocation7], 64, 64, 4
    $region9: #{tpu_custom_call.1} parent=1 // pred_fallthru
      _
    // Predicated region
    $region10: #{tpu_custom_call.1} parent=1 // pred_check
      _
    $region11: #{tpu_custom_call.1} parent=1 // pred_check_branch
      %36 = sbr.rel (0) target = $region13
    $region12: #{tpu_custom_call.1} parent=1 // pred_region
      _
    $region13: #{tpu_custom_call.1} parent=1 // pred_fallthru
      _
    // Predicated region
    $region14: #{tpu_custom_call.1} parent=1 // pred_check
      _
    $region15: #{tpu_custom_call.1} parent=1 // pred_check_branch
      %38 = sbr.rel (0) target = $region17
    $region16: #{tpu_custom_call.1} parent=1 // pred_region
      %39 = dma.done [#allocation4], 1024
    $region17: #{tpu_custom_call.1} parent=1 // pred_fallthru
      _
    // Predicated region
    $region18: #{tpu_custom_call.1} parent=1 // pred_check
      _
    $region19: #{tpu_custom_call.1} parent=1 // pred_check_branch
      %41 = sbr.rel (0) target = $region21
    $region20: #{tpu_custom_call.1} parent=1 // pred_region
      %42 = dma.done [#allocation7], 1024
    $region21: #{tpu_custom_call.1} parent=1 // pred_fallthru
      _
    %p44 = scmp.eq.s32.totalorder 0, 0
    // Predicated region
    $region22: #{tpu_custom_call.1} parent=1 // pred_check
      %p45 = pneg %p44
    $region23: #{tpu_custom_call.1} parent=1 // pred_check_branch
      %47 = sbr.rel (%p45) target = $region25
    $region24: #{tpu_custom_call.1} parent=1 // pred_region
      %48 = vst [vmem:[#allocation2] sm:$0xff] 0.0
      %49 = vst [vmem:[#allocation2 + $0x8] sm:$0xff] 0.0
      %50 = vst [vmem:[#allocation2 + $0x10] sm:$0xff] 0.0
      %51 = vst [vmem:[#allocation2 + $0x18] sm:$0xff] 0.0
      %52 = vst [vmem:[#allocation2 + $0x20] sm:$0xff] 0.0
      %53 = vst [vmem:[#allocation2 + $0x28] sm:$0xff] 0.0
      %54 = vst [vmem:[#allocation2 + $0x30] sm:$0xff] 0.0
      %55 = vst [vmem:[#allocation2 + $0x38] sm:$0xff] 0.0
      %56 = vst [vmem:[#allocation2 + $0x40] sm:$0xff] 0.0
      %57 = vst [vmem:[#allocation2 + $0x48] sm:$0xff] 0.0
      %58 = vst [vmem:[#allocation2 + $0x50] sm:$0xff] 0.0
      %59 = vst [vmem:[#allocation2 + $0x58] sm:$0xff] 0.0
      %60 = vst [vmem:[#allocation2 + $0x60] sm:$0xff] 0.0
      %61 = vst [vmem:[#allocation2 + $0x68] sm:$0xff] 0.0
      %62 = vst [vmem:[#allocation2 + $0x70] sm:$0xff] 0.0
      %63 = vst [vmem:[#allocation2 + $0x78] sm:$0xff] 0.0
    $region25: #{tpu_custom_call.1} parent=1 // pred_fallthru
      _
    %v64 = vld [vmem:[#allocation2] sm:$0xff]
    %v65 = vld [vmem:[#allocation2 + $0x8] sm:$0xff]
    %v66 = vld [vmem:[#allocation2 + $0x10] sm:$0xff]
    %v67 = vld [vmem:[#allocation2 + $0x18] sm:$0xff]
    %v68 = vld [vmem:[#allocation2 + $0x20] sm:$0xff]
    %v69 = vld [vmem:[#allocation2 + $0x28] sm:$0xff]
    %v70 = vld [vmem:[#allocation2 + $0x30] sm:$0xff]
    %v71 = vld [vmem:[#allocation2 + $0x38] sm:$0xff]
    %v72 = vld [vmem:[#allocation2 + $0x40] sm:$0xff]
    %v73 = vld [vmem:[#allocation2 + $0x48] sm:$0xff]
    %v74 = vld [vmem:[#allocation2 + $0x50] sm:$0xff]
    %v75 = vld [vmem:[#allocation2 + $0x58] sm:$0xff]
    %v76 = vld [vmem:[#allocation2 + $0x60] sm:$0xff]
    %v77 = vld [vmem:[#allocation2 + $0x68] sm:$0xff]
    %v78 = vld [vmem:[#allocation2 + $0x70] sm:$0xff]
    %v79 = vld [vmem:[#allocation2 + $0x78] sm:$0xff]
    %v80 = vld [vmem:[#allocation3] sm:$0xf]
    %v81 = vld [vmem:[#allocation3 + $0x4] sm:$0xf]
    %v82 = vld [vmem:[#allocation3 + $0x8] sm:$0xf]
    %v83 = vld [vmem:[#allocation3 + $0xc] sm:$0xf]
    %v84 = vld [vmem:[#allocation3 + $0x10] sm:$0xf]
    %v85 = vld [vmem:[#allocation3 + $0x14] sm:$0xf]
    %v86 = vld [vmem:[#allocation3 + $0x18] sm:$0xf]
    %v87 = vld [vmem:[#allocation3 + $0x1c] sm:$0xf]
    %v88 = vld [vmem:[#allocation3 + $0x20] sm:$0xf]
    %v89 = vld [vmem:[#allocation3 + $0x24] sm:$0xf]
    %v90 = vld [vmem:[#allocation3 + $0x28] sm:$0xf]
    %v91 = vld [vmem:[#allocation3 + $0x2c] sm:$0xf]
    %v92 = vld [vmem:[#allocation3 + $0x30] sm:$0xf]
    %v93 = vld [vmem:[#allocation3 + $0x34] sm:$0xf]
    %v94 = vld [vmem:[#allocation3 + $0x38] sm:$0xf]
    %v95 = vld [vmem:[#allocation3 + $0x3c] sm:$0xf]
    %v96 = vld [vmem:[#allocation6] sm:$0xf]
    %v97 = vld [vmem:[#allocation6 + $0x4] sm:$0xf]
    %v98 = vld [vmem:[#allocation6 + $0x8] sm:$0xf]
    %v99 = vld [vmem:[#allocation6 + $0xc] sm:$0xf]
    %v100 = vld [vmem:[#allocation6 + $0x10] sm:$0xf]
    %v101 = vld [vmem:[#allocation6 + $0x14] sm:$0xf]
    %v102 = vld [vmem:[#allocation6 + $0x18] sm:$0xf]
    %v103 = vld [vmem:[#allocation6 + $0x1c] sm:$0xf]
    %v104 = vld [vmem:[#allocation6 + $0x20] sm:$0xf]
    %v105 = vld [vmem:[#allocation6 + $0x24] sm:$0xf]
    %v106 = vld [vmem:[#allocation6 + $0x28] sm:$0xf]
    %v107 = vld [vmem:[#allocation6 + $0x2c] sm:$0xf]
    %v108 = vld [vmem:[#allocation6 + $0x30] sm:$0xf]
    %v109 = vld [vmem:[#allocation6 + $0x34] sm:$0xf]
    %v110 = vld [vmem:[#allocation6 + $0x38] sm:$0xf]
    %v111 = vld [vmem:[#allocation6 + $0x3c] sm:$0xf]
    %v128 = vunpack.c.l.b16 %v80
    %v129 = vunpack.c.l.b16 %v81
    %v130 = vunpack.c.l.b16 %v82
    %v131 = vunpack.c.l.b16 %v83
    %v132 = vunpack.c.l.b16 %v84
    %v133 = vunpack.c.l.b16 %v85
    %v134 = vunpack.c.l.b16 %v86
    %v135 = vunpack.c.l.b16 %v87
    %v136 = vunpack.c.l.b16 %v88
    %v137 = vunpack.c.l.b16 %v89
    %v138 = vunpack.c.l.b16 %v90
    %v139 = vunpack.c.l.b16 %v91
    %v140 = vunpack.c.l.b16 %v92
    %v141 = vunpack.c.l.b16 %v93
    %v142 = vunpack.c.l.b16 %v94
    %v143 = vunpack.c.l.b16 %v95
    %v144 = vpack.c.b16 %v129, %v128
    %v145 = vpack.c.b16 %v131, %v130
    %v146 = vpack.c.b16 %v133, %v132
    %v147 = vpack.c.b16 %v135, %v134
    %v148 = vpack.c.b16 %v137, %v136
    %v149 = vpack.c.b16 %v139, %v138
    %v150 = vpack.c.b16 %v141, %v140
    %v151 = vpack.c.b16 %v143, %v142
    %v176 = vunpack.c.l.b16 %v96
    %v177 = vunpack.c.l.b16 %v97
    %v178 = vunpack.c.l.b16 %v98
    %v179 = vunpack.c.l.b16 %v99
    %v180 = vunpack.c.l.b16 %v100
    %v181 = vunpack.c.l.b16 %v101
    %v182 = vunpack.c.l.b16 %v102
    %v183 = vunpack.c.l.b16 %v103
    %v184 = vunpack.c.l.b16 %v104
    %v185 = vunpack.c.l.b16 %v105
    %v186 = vunpack.c.l.b16 %v106
    %v187 = vunpack.c.l.b16 %v107
    %v188 = vunpack.c.l.b16 %v108
    %v189 = vunpack.c.l.b16 %v109
    %v190 = vunpack.c.l.b16 %v110
    %v191 = vunpack.c.l.b16 %v111
    %v192 = vpack.c.b16 %v177, %v176
    %v193 = vpack.c.b16 %v179, %v178
    %v194 = vpack.c.b16 %v181, %v180
    %v195 = vpack.c.b16 %v183, %v182
    %v196 = vpack.c.b16 %v185, %v184
    %v197 = vpack.c.b16 %v187, %v186
    %v198 = vpack.c.b16 %v189, %v188
    %v199 = vpack.c.b16 %v191, %v190
    %208 = vmatprep.subr.bf16.mxu0 0
    %209 = vmatpush1.bf16.msra.mxu0 %v192
    %210 = vmatprep.subr.bf16.mxu0 0
    %211 = vmatpush1.bf16.msra.mxu0 %v193
    %212 = vmatprep.subr.bf16.mxu0 0
    %213 = vmatpush1.bf16.msra.mxu0 %v194
    %214 = vmatprep.subr.bf16.mxu0 0
    %215 = vmatpush1.bf16.msra.mxu0 %v195
    %216 = vmatprep.subr.bf16.mxu0 0
    %217 = vmatpush1.bf16.msra.mxu0 %v196
    %218 = vmatprep.subr.bf16.mxu0 0
    %219 = vmatpush1.bf16.msra.mxu0 %v197
    %220 = vmatprep.subr.bf16.mxu0 0
    %221 = vmatpush1.bf16.msra.mxu0 %v198
    %222 = vmatprep.subr.bf16.mxu0 0
    %223 = vmatpush1.bf16.msra.mxu0 %v199
    %224 = vmatprep.subr.bf16.mxu0 0
    %225 = vmatpush1.bf16.msra.mxu0 0
    %226 = vmatprep.subr.bf16.mxu0 0
    %227 = vmatpush1.bf16.msra.mxu0 0
    %228 = vmatprep.subr.bf16.mxu0 0
    %229 = vmatpush1.bf16.msra.mxu0 0
    %230 = vmatprep.subr.bf16.mxu0 0
    %231 = vmatpush1.bf16.msra.mxu0 0
    %232 = vmatprep.subr.bf16.mxu0 0
    %233 = vmatpush1.bf16.msra.mxu0 0
    %234 = vmatprep.subr.bf16.mxu0 0
    %235 = vmatpush1.bf16.msra.mxu0 0
    %236 = vmatprep.subr.bf16.mxu0 0
    %237 = vmatpush1.bf16.msra.mxu0 0
    %238 = vmatprep.subr.bf16.mxu0 0
    %239 = vmatpush1.bf16.msra.mxu0 0
    %240 = vmatprep.mubr.bf16.mxu0 0
    %241 = vmatmul.mubr.bf16.gmra.mrb[0].mxu0 %v144
    %v242 = vpop.f32.mrb[0].mxu0
    %v243 = vadd.f32 0.0, %v242
    %v244 = vpop.f32.mrb[0].mxu0
    %v245 = vpop.f32.mrb[0].mxu0
    %v246 = vadd.f32 0.0, %v245
    %v247 = vpop.f32.mrb[0].mxu0
    %248 = vmatprep.mubr.bf16.mxu0 0
    %249 = vmatmul.mubr.bf16.gmra.mrb[0].mxu0 %v145
    %v250 = vpop.f32.mrb[0].mxu0
    %v251 = vadd.f32 0.0, %v250
    %v252 = vpop.f32.mrb[0].mxu0
    %v253 = vpop.f32.mrb[0].mxu0
    %v254 = vadd.f32 0.0, %v253
    %v255 = vpop.f32.mrb[0].mxu0
    %256 = vmatprep.mubr.bf16.mxu0 0
    %257 = vmatmul.mubr.bf16.gmra.mrb[0].mxu0 %v146
    %v258 = vpop.f32.mrb[0].mxu0
    %v259 = vadd.f32 0.0, %v258
    %v260 = vpop.f32.mrb[0].mxu0
    %v261 = vpop.f32.mrb[0].mxu0
    %v262 = vadd.f32 0.0, %v261
    %v263 = vpop.f32.mrb[0].mxu0
    %264 = vmatprep.mubr.bf16.mxu0 0
    %265 = vmatmul.mubr.bf16.gmra.mrb[0].mxu0 %v147
    %v266 = vpop.f32.mrb[0].mxu0
    %v267 = vadd.f32 0.0, %v266
    %v268 = vpop.f32.mrb[0].mxu0
    %v269 = vpop.f32.mrb[0].mxu0
    %v270 = vadd.f32 0.0, %v269
    %v271 = vpop.f32.mrb[0].mxu0
    %272 = vmatprep.mubr.bf16.mxu0 0
    %273 = vmatmul.mubr.bf16.gmra.mrb[0].mxu0 %v148
    %v274 = vpop.f32.mrb[0].mxu0
    %v275 = vadd.f32 0.0, %v274
    %v276 = vpop.f32.mrb[0].mxu0
    %v277 = vpop.f32.mrb[0].mxu0
    %v278 = vadd.f32 0.0, %v277
    %v279 = vpop.f32.mrb[0].mxu0
    %280 = vmatprep.mubr.bf16.mxu0 0
    %281 = vmatmul.mubr.bf16.gmra.mrb[0].mxu0 %v149
    %v282 = vpop.f32.mrb[0].mxu0
    %v283 = vadd.f32 0.0, %v282
    %v284 = vpop.f32.mrb[0].mxu0
    %v285 = vpop.f32.mrb[0].mxu0
    %v286 = vadd.f32 0.0, %v285
    %v287 = vpop.f32.mrb[0].mxu0
    %288 = vmatprep.mubr.bf16.mxu0 0
    %289 = vmatmul.mubr.bf16.gmra.mrb[0].mxu0 %v150
    %v290 = vpop.f32.mrb[0].mxu0
    %v291 = vadd.f32 0.0, %v290
    %v292 = vpop.f32.mrb[0].mxu0
    %v293 = vpop.f32.mrb[0].mxu0
    %v294 = vadd.f32 0.0, %v293
    %v295 = vpop.f32.mrb[0].mxu0
    %296 = vmatprep.mubr.bf16.mxu0 0
    %297 = vmatmul.mubr.bf16.gmra.mrb[0].mxu0 %v151
    %v298 = vpop.f32.mrb[0].mxu0
    %v299 = vadd.f32 0.0, %v298
    %v300 = vpop.f32.mrb[0].mxu0
    %v301 = vpop.f32.mrb[0].mxu0
    %v302 = vadd.f32 0.0, %v301
    %v303 = vpop.f32.mrb[0].mxu0
    %304 = vdwg.mxu0
    %v305 = vadd.f32 %v64, %v243
    %v306 = vadd.f32 %v65, %v246
    %v307 = vadd.f32 %v66, %v251
    %v308 = vadd.f32 %v67, %v254
    %v309 = vadd.f32 %v68, %v259
    %v310 = vadd.f32 %v69, %v262
    %v311 = vadd.f32 %v70, %v267
    %v312 = vadd.f32 %v71, %v270
    %v313 = vadd.f32 %v72, %v275
    %v314 = vadd.f32 %v73, %v278
    %v315 = vadd.f32 %v74, %v283
    %v316 = vadd.f32 %v75, %v286
    %v317 = vadd.f32 %v76, %v291
    %v318 = vadd.f32 %v77, %v294
    %v319 = vadd.f32 %v78, %v299
    %v320 = vadd.f32 %v79, %v302
    %321 = vst [vmem:[#allocation2] sm:$0xff] %v305
    %322 = vst [vmem:[#allocation2 + $0x8] sm:$0xff] %v306
    %323 = vst [vmem:[#allocation2 + $0x10] sm:$0xff] %v307
    %324 = vst [vmem:[#allocation2 + $0x18] sm:$0xff] %v308
    %325 = vst [vmem:[#allocation2 + $0x20] sm:$0xff] %v309
    %326 = vst [vmem:[#allocation2 + $0x28] sm:$0xff] %v310
    %327 = vst [vmem:[#allocation2 + $0x30] sm:$0xff] %v311
    %328 = vst [vmem:[#allocation2 + $0x38] sm:$0xff] %v312
    %329 = vst [vmem:[#allocation2 + $0x40] sm:$0xff] %v313
    %330 = vst [vmem:[#allocation2 + $0x48] sm:$0xff] %v314
    %331 = vst [vmem:[#allocation2 + $0x50] sm:$0xff] %v315
    %332 = vst [vmem:[#allocation2 + $0x58] sm:$0xff] %v316
    %333 = vst [vmem:[#allocation2 + $0x60] sm:$0xff] %v317
    %334 = vst [vmem:[#allocation2 + $0x68] sm:$0xff] %v318
    %335 = vst [vmem:[#allocation2 + $0x70] sm:$0xff] %v319
    %336 = vst [vmem:[#allocation2 + $0x78] sm:$0xff] %v320
    // Predicated region
    $region26: #{tpu_custom_call.1} parent=1 // pred_check
      %p337 = pneg %p44
    $region27: #{tpu_custom_call.1} parent=1 // pred_check_branch
      %339 = sbr.rel (%p337) target = $region29
    $region28: #{tpu_custom_call.1} parent=1 // pred_region
      %v340 = vld [vmem:[#allocation2] sm:$0xff]
      %v341 = vld [vmem:[#allocation2 + $0x8] sm:$0xff]
      %v342 = vld [vmem:[#allocation2 + $0x10] sm:$0xff]
      %v343 = vld [vmem:[#allocation2 + $0x18] sm:$0xff]
      %v344 = vld [vmem:[#allocation2 + $0x20] sm:$0xff]
      %v345 = vld [vmem:[#allocation2 + $0x28] sm:$0xff]
      %v346 = vld [vmem:[#allocation2 + $0x30] sm:$0xff]
      %v347 = vld [vmem:[#allocation2 + $0x38] sm:$0xff]
      %v348 = vld [vmem:[#allocation2 + $0x40] sm:$0xff]
      %v349 = vld [vmem:[#allocation2 + $0x48] sm:$0xff]
      %v350 = vld [vmem:[#allocation2 + $0x50] sm:$0xff]
      %v351 = vld [vmem:[#allocation2 + $0x58] sm:$0xff]
      %v352 = vld [vmem:[#allocation2 + $0x60] sm:$0xff]
      %v353 = vld [vmem:[#allocation2 + $0x68] sm:$0xff]
      %v354 = vld [vmem:[#allocation2 + $0x70] sm:$0xff]
      %v355 = vld [vmem:[#allocation2 + $0x78] sm:$0xff]
      %v356 = vld [vmem:[%s2] sm:$0x1]
      %v358 = vlaneseq
      %v359 = vshrl.u32 %v358, 7
      %v360 = vsub.s32 0, %v359
      %v361 = vrot.slane %v356, %v360
      %v363 = vadd.f32 %v340, %v361
      %v364 = vadd.f32 %v341, %v361
      %v365 = vadd.f32 %v342, %v361
      %v366 = vadd.f32 %v343, %v361
      %v367 = vadd.f32 %v344, %v361
      %v368 = vadd.f32 %v345, %v361
      %v369 = vadd.f32 %v346, %v361
      %v370 = vadd.f32 %v347, %v361
      %v371 = vadd.f32 %v348, %v361
      %v372 = vadd.f32 %v349, %v361
      %v373 = vadd.f32 %v350, %v361
      %v374 = vadd.f32 %v351, %v361
      %v375 = vadd.f32 %v352, %v361
      %v376 = vadd.f32 %v353, %v361
      %v377 = vadd.f32 %v354, %v361
      %v378 = vadd.f32 %v355, %v361
      %v379 = vmax.f32 %v363, 0.0
      %v380 = vmax.f32 %v364, 0.0
      %v381 = vmax.f32 %v365, 0.0
      %v382 = vmax.f32 %v366, 0.0
      %v383 = vmax.f32 %v367, 0.0
      %v384 = vmax.f32 %v368, 0.0
      %v385 = vmax.f32 %v369, 0.0
      %v386 = vmax.f32 %v370, 0.0
      %v387 = vmax.f32 %v371, 0.0
      %v388 = vmax.f32 %v372, 0.0
      %v389 = vmax.f32 %v373, 0.0
      %v390 = vmax.f32 %v374, 0.0
      %v391 = vmax.f32 %v375, 0.0
      %v392 = vmax.f32 %v376, 0.0
      %v393 = vmax.f32 %v377, 0.0
      %v394 = vmax.f32 %v378, 0.0
      %v395 = vpack.c.bf16 %v380, %v379
      %v396 = vpack.c.bf16 %v382, %v381
      %v397 = vpack.c.bf16 %v384, %v383
      %v398 = vpack.c.bf16 %v386, %v385
      %v399 = vpack.c.bf16 %v388, %v387
      %v400 = vpack.c.bf16 %v390, %v389
      %v401 = vpack.c.bf16 %v392, %v391
      %v402 = vpack.c.bf16 %v394, %v393
      %v411 = vunpack.c.l.b16 %v395
      %v412 = vunpack.c.h.b16 %v395
      %v413 = vunpack.c.l.b16 %v396
      %v414 = vunpack.c.h.b16 %v396
      %v415 = vunpack.c.l.b16 %v397
      %v416 = vunpack.c.h.b16 %v397
      %v417 = vunpack.c.l.b16 %v398
      %v418 = vunpack.c.h.b16 %v398
      %v419 = vunpack.c.l.b16 %v399
      %v420 = vunpack.c.h.b16 %v399
      %v421 = vunpack.c.l.b16 %v400
      %v422 = vunpack.c.h.b16 %v400
      %v423 = vunpack.c.l.b16 %v401
      %v424 = vunpack.c.h.b16 %v401
      %v425 = vunpack.c.l.b16 %v402
      %v426 = vunpack.c.h.b16 %v402
      %v427 = vpack.c.b16 %v411, %v411
      %v428 = vpack.c.b16 %v412, %v412
      %v429 = vpack.c.b16 %v413, %v413
      %v430 = vpack.c.b16 %v414, %v414
      %v431 = vpack.c.b16 %v415, %v415
      %v432 = vpack.c.b16 %v416, %v416
      %v433 = vpack.c.b16 %v417, %v417
      %v434 = vpack.c.b16 %v418, %v418
      %v435 = vpack.c.b16 %v419, %v419
      %v436 = vpack.c.b16 %v420, %v420
      %v437 = vpack.c.b16 %v421, %v421
      %v438 = vpack.c.b16 %v422, %v422
      %v439 = vpack.c.b16 %v423, %v423
      %v440 = vpack.c.b16 %v424, %v424
      %v441 = vpack.c.b16 %v425, %v425
      %v442 = vpack.c.b16 %v426, %v426
      %459 = vst [vmem:[#allocation8] sm:$0xf] %v427
      %460 = vst [vmem:[#allocation8 + $0x4] sm:$0xf] %v428
      %461 = vst [vmem:[#allocation8 + $0x8] sm:$0xf] %v429
      %462 = vst [vmem:[#allocation8 + $0xc] sm:$0xf] %v430
      %463 = vst [vmem:[#allocation8 + $0x10] sm:$0xf] %v431
      %464 = vst [vmem:[#allocation8 + $0x14] sm:$0xf] %v432
      %465 = vst [vmem:[#allocation8 + $0x18] sm:$0xf] %v433
      %466 = vst [vmem:[#allocation8 + $0x1c] sm:$0xf] %v434
      %467 = vst [vmem:[#allocation8 + $0x20] sm:$0xf] %v435
      %468 = vst [vmem:[#allocation8 + $0x24] sm:$0xf] %v436
      %469 = vst [vmem:[#allocation8 + $0x28] sm:$0xf] %v437
      %470 = vst [vmem:[#allocation8 + $0x2c] sm:$0xf] %v438
      %471 = vst [vmem:[#allocation8 + $0x30] sm:$0xf] %v439
      %472 = vst [vmem:[#allocation8 + $0x34] sm:$0xf] %v440
      %473 = vst [vmem:[#allocation8 + $0x38] sm:$0xf] %v441
      %474 = vst [vmem:[#allocation8 + $0x3c] sm:$0xf] %v442
    $region29: #{tpu_custom_call.1} parent=1 // pred_fallthru
      _
    // Predicated region
    $region30: #{tpu_custom_call.1} parent=1 // pred_check
      _
    $region31: #{tpu_custom_call.1} parent=1 // pred_check_branch
      %476 = sbr.rel (0) target = $region33
    $region32: #{tpu_custom_call.1} parent=1 // pred_region
      %s478 = ssub.s32 1024, 1024
      %479 = vsyncadd [#allocation5], %s478
      %s480 = sshll.u32 [#allocation8], 4
      %s481 = int_to_ptr.vmem [resolvable:$true] %s480
      %486 = dma.vmem_to_hbm [thread:$0]  %s481, 1024, %s3, [#allocation5], 64, 64, 4
    $region33: #{tpu_custom_call.1} parent=1 // pred_fallthru
      _
    // Predicated region
    $region34: #{tpu_custom_call.1} parent=1 // pred_check
      _
    $region35: #{tpu_custom_call.1} parent=1 // pred_check_branch
      %488 = sbr.rel (0) target = $region37
    $region36: #{tpu_custom_call.1} parent=1 // pred_region
      %489 = dma.done [#allocation5], 1024
    $region37: #{tpu_custom_call.1} parent=1 // pred_fallthru
      _
    %490 = vsyncpa [#allocation4], 1
    %491 = vsyncpa [#allocation7], 1
    %492 = vsyncpa [#allocation5], 1

</llo_original>
